<compile_context>
chip_gen: v5e
topology: v5e:2x2
jax: 0.10.0
libtpu: 0.0.40
codegen_flags: <defaults>
</compile_context>

<pallas_src>
import math
import functools

import jax
import jax.numpy as jnp
from jax.experimental import pallas as pl
from jax.experimental.pallas import tpu as pltpu


# ---------------------------------------------------------------------------
# Helpers
# ---------------------------------------------------------------------------
def _layernorm_f32(x_f32, g, b, eps=1e-5):
    g = g.astype(jnp.float32)
    b = b.astype(jnp.float32)
    mu = jnp.mean(x_f32, axis=-1, keepdims=True)
    var = jnp.mean(jnp.square(x_f32 - mu), axis=-1, keepdims=True)
    return (x_f32 - mu) * jax.lax.rsqrt(var + eps) * g + b


def _pick_tile(n, cap):
    """Largest tile <= cap that divides n and is a multiple of 8 (else n)."""
    if n <= cap:
        return n
    for t in range(cap, 7, -1):
        if n % t == 0 and t % 8 == 0:
            return t
    return n


def _spec(shape, index_map, buffers=None):
    """BlockSpec with optional non-default pipelining depth."""
    if buffers is None or buffers == 2:
        return pl.BlockSpec(shape, index_map)
    return pl.BlockSpec(shape, index_map, pipeline_mode=pl.Buffered(buffers))


# ---------------------------------------------------------------------------
# Kernel A: LN1 + fused QKV projection (row-tiled), head-major Q | K | V out
# ---------------------------------------------------------------------------
def _ln1_qkv_kernel(x_ref, ln1g_ref, ln1b_ref, w3_ref, b3_ref,
                    q_ref, k_ref, v_ref):
    Wd = x_ref.shape[-1]
    x = x_ref[...].astype(jnp.float32)                       # (t_rows, W)
    h = _layernorm_f32(x, ln1g_ref[...], ln1b_ref[...]).astype(w3_ref.dtype)
    # single N=3W matmul (better MXU fill than three N=W dots)
    qkv = (jnp.dot(h, w3_ref[...], preferred_element_type=jnp.float32)
           + b3_ref[...].astype(jnp.float32))                # (t_rows, 3W)
    # lane-aligned W-wide slices (Q/K scale already folded into w3/b3)
    q_ref[...] = qkv[:, :Wd].astype(q_ref.dtype)
    k_ref[...] = qkv[:, Wd:2 * Wd].astype(k_ref.dtype)
    v_ref[...] = qkv[:, 2 * Wd:].astype(v_ref.dtype)


# ---------------------------------------------------------------------------
# Kernel B: flash attention (online softmax, head-batched) + c_proj + residual
#           + LN2 + MLP + residual, fused into the last kv step of each q tile
# ---------------------------------------------------------------------------
def _attn_mlp_kernel(q_ref, k_ref, v_ref, x_ref,
                     wproj_ref, bproj_ref, ln2g_ref, ln2b_ref,
                     wfc_ref, bfc_ref, wout_ref, bout_ref,
                     o_ref,
                     m_sc, l_sc, acc_sc,
                     *, heads: int):
    tq, W = q_ref.shape
    tkv = k_ref.shape[0]
    attn_ch = W // heads

    ki = pl.program_id(2)

    @pl.when(ki == 0)
    def _init():
        m_sc[...] = jnp.full(m_sc.shape, -jnp.inf, dtype=jnp.float32)
        l_sc[...] = jnp.zeros(l_sc.shape, dtype=jnp.float32)
        acc_sc[...] = jnp.zeros(acc_sc.shape, dtype=jnp.float32)

    # q/k/v arrive in their storage (param) dtype with the softmax scale
    # already folded into the projection weights; only a view reshape remains.
    qh = q_ref[...].reshape(tq, heads, attn_ch)
    kh = k_ref[...].reshape(tkv, heads, attn_ch)
    vh = v_ref[...].reshape(tkv, heads, attn_ch)

    # NOTE: with attn_ch well below the MXU contraction depth (e.g. 32 vs
    # 256 on v6e/v7x) the score matmul under-fills the MXU; real configs with
    # head_dim 64/128 fare much better.
    s = jnp.einsum("qhc,khc->hqk", qh, kh,
                   preferred_element_type=jnp.float32)        # (h, tq, tkv)

    m_prev = m_sc[...]                                        # (h, tq)
    m_new = jnp.maximum(m_prev, jnp.max(s, axis=-1))          # (h, tq)
    alpha = jnp.exp(m_prev - m_new)                           # (h, tq)
    p = jnp.exp(s - m_new[:, :, None])                        # (h, tq, tkv)
    l_sc[...] = alpha * l_sc[...] + jnp.sum(p, axis=-1)
    m_sc[...] = m_new

    # q-major weighted-value accumulation; only the tiny (h, tq) alpha is
    # transposed, the (tq, heads, attn_ch) accumulator is never transposed.
    pv = jnp.einsum("hqk,khc->qhc", p.astype(vh.dtype), vh,
                    preferred_element_type=jnp.float32)       # (tq, h, c)
    acc_sc[...] = alpha.T[:, :, None] * acc_sc[...] + pv

    @pl.when(ki == pl.num_programs(2) - 1)
    def _finalize():
        # softmax normalization: EUP approximate reciprocal, once per q tile
        inv_l = pl.reciprocal(l_sc[...], approx=True)         # (h, tq)
        attn = (acc_sc[...] * inv_l.T[:, :, None]).reshape(tq, W)
        attn = attn.astype(wproj_ref.dtype)

        proj = (jnp.dot(attn, wproj_ref[...], preferred_element_type=jnp.float32)
                + bproj_ref[...].astype(jnp.float32))
        x1 = x_ref[...].astype(jnp.float32) + proj            # residual 1 (f32)

        h2 = _layernorm_f32(x1, ln2g_ref[...], ln2b_ref[...])
        ff = (jnp.dot(h2.astype(wfc_ref.dtype), wfc_ref[...],
                      preferred_element_type=jnp.float32)
              + bfc_ref[...].astype(jnp.float32))
        ff = jax.nn.gelu(ff, approximate=False)               # torch nn.GELU (exact)
        ff = (jnp.dot(ff.astype(wout_ref.dtype), wout_ref[...],
                      preferred_element_type=jnp.float32)
              + bout_ref[...].astype(jnp.float32))

        o_ref[...] = (x1 + ff).astype(o_ref.dtype)            # residual 2


# ---------------------------------------------------------------------------
# Wrapper
# ---------------------------------------------------------------------------
def residual_attention_block(x, params, *, heads: int,
                             block_q: int = 512, block_kv: int = 512,
                             block_rows: int = 512,
                             qkv_dtype=None,
                             vmem_limit_bytes=None,
                             kv_buffers=None,       # e.g. 3 on v5e if kv DMA exposed
                             weight_buffers=None):  # e.g. 1 on v7x (no double-buffer of weights)
    bs, n_ctx, W = x.shape
    assert W % heads == 0, "width must be divisible by heads"
    attn_ch = W // heads
    param_dtype = params["w_qkv"].dtype
    if qkv_dtype is None:
        qkv_dtype = param_dtype          # bf16 params -> bf16 q/k/v intermediates

    if vmem_limit_bytes is None:
        # ~3/4 of physical VMEM (48 MiB on v7x, ~96 MiB on v5e/v6e), modest fallback.
        try:
            phys = pltpu.get_tpu_info().vmem_capacity_bytes
            vmem_limit_bytes = min(int(phys * 3 // 4), 100 * 1024 * 1024)
        except Exception:
            vmem_limit_bytes = 64 * 1024 * 1024

    # --- permute c_qkv columns: torch interleaved per-head [q|k|v] ->
    #     head-major contiguous Q | K | V blocks, and fold the
    #     1/sqrt(sqrt(attn_ch)) scale into Q and K (in f32, before any cast).
    scale = 1.0 / math.sqrt(math.sqrt(attn_ch))
    qk_scale_w = jnp.array([scale, scale, 1.0], jnp.float32).reshape(1, 1, 3, 1)
    qk_scale_b = jnp.array([scale, scale, 1.0], jnp.float32).reshape(1, 3, 1)

    w4 = params["w_qkv"].astype(jnp.float32).reshape(W, heads, 3, attn_ch) * qk_scale_w
    b4 = params["b_qkv"].astype(jnp.float32).reshape(heads, 3, attn_ch) * qk_scale_b
    w3 = jnp.transpose(w4, (0, 2, 1, 3)).reshape(W, 3 * W).astype(param_dtype)
    b3 = jnp.transpose(b4, (1, 0, 2)).reshape(1, 3 * W).astype(jnp.float32)

    # ---------------- Kernel A: LN1 + fused QKV projection ----------------
    t_rows = _pick_tile(n_ctx, block_rows)
    row_spec_a = pl.BlockSpec((None, t_rows, W), lambda b, i: (b, i, 0))
    full_a = lambda arr: pl.BlockSpec(arr.shape,
                                      lambda b, i, nd=arr.ndim: (0,) * nd)

    q, k, v = pl.pallas_call(
        _ln1_qkv_kernel,
        out_shape=tuple(jax.ShapeDtypeStruct((bs, n_ctx, W), qkv_dtype)
                        for _ in range(3)),
        grid_spec=pltpu.PrefetchScalarGridSpec(
            num_scalar_prefetch=0,
            grid=(bs, n_ctx // t_rows),
            in_specs=[row_spec_a,
                      full_a(params["ln1_g"]), full_a(params["ln1_b"]),
                      full_a(w3), full_a(b3)],
            out_specs=[row_spec_a, row_spec_a, row_spec_a],
        ),
        compiler_params=pltpu.CompilerParams(
            dimension_semantics=("parallel", "parallel"),
            vmem_limit_bytes=vmem_limit_bytes),
    )(x, params["ln1_g"], params["ln1_b"], w3, b3)

    # ---------------- Kernel B: flash attention + proj + MLP ----------------
    tq = _pick_tile(n_ctx, block_q)
    tkv = _pick_tile(n_ctx, block_kv)
    n_q = n_ctx // tq
    n_kv = n_ctx // tkv

    q_spec = pl.BlockSpec((None, tq, W), lambda b, qi, ki: (b, qi, 0))
    kv_spec = _spec((None, tkv, W), lambda b, qi, ki: (b, ki, 0),
                    buffers=kv_buffers)
    full_b = lambda arr, buf=None: _spec(
        arr.shape, lambda b, qi, ki, nd=arr.ndim: (0,) * nd, buffers=buf)

    # TODO(synk): for very large widths (e.g. W>=1024 f32 on v7x's 64 MiB VMEM),
    # stream w_fc / w_out over the 4W hidden dim (memory_space=pl.ANY +
    # emit_pipeline) instead of keeping them fully resident.
    kernel = functools.partial(_attn_mlp_kernel, heads=heads)
    out = pl.pallas_call(
        kernel,
        out_shape=jax.ShapeDtypeStruct((bs, n_ctx, W), x.dtype),
        grid_spec=pltpu.PrefetchScalarGridSpec(
            num_scalar_prefetch=0,
            grid=(bs, n_q, n_kv),
            in_specs=[q_spec, kv_spec, kv_spec, q_spec,
                      full_b(params["w_proj"], weight_buffers),
                      full_b(params["b_proj"]),
                      full_b(params["ln2_g"]), full_b(params["ln2_b"]),
                      full_b(params["w_fc"], weight_buffers),
                      full_b(params["b_fc"]),
                      full_b(params["w_out"], weight_buffers),
                      full_b(params["b_out"])],
            out_specs=q_spec,
            scratch_shapes=[pltpu.VMEM((heads, tq), jnp.float32),          # m (lane-dense)
                            pltpu.VMEM((heads, tq), jnp.float32),          # l (lane-dense)
                            pltpu.VMEM((tq, heads, attn_ch), jnp.float32)],  # acc (q-major)
        ),
        compiler_params=pltpu.CompilerParams(
            dimension_semantics=("parallel", "parallel", "arbitrary"),
            vmem_limit_bytes=vmem_limit_bytes),
    )(q, k, v, x,
      params["w_proj"], params["b_proj"],
      params["ln2_g"], params["ln2_b"],
      params["w_fc"], params["b_fc"],
      params["w_out"], params["b_out"])
    return out


# ---------------------------------------------------------------------------
# Pure-JAX reference (matches the PyTorch module; checkpoint() is a no-op in fwd)
# ---------------------------------------------------------------------------
def _reference(x, p, heads):
    def ln(v, g, b):
        mu = jnp.mean(v, axis=-1, keepdims=True)
        var = jnp.mean((v - mu) ** 2, axis=-1, keepdims=True)
        return (v - mu) / jnp.sqrt(var + 1e-5) * g + b

    bs, n_ctx, W = x.shape
    attn_ch = W // heads
    scale = 1.0 / math.sqrt(math.sqrt(attn_ch))

    h = ln(x, p["ln1_g"][0], p["ln1_b"][0])
    qkv = h @ p["w_qkv"] + p["b_qkv"][0]
    qkv = qkv.reshape(bs, n_ctx, heads, 3 * attn_ch)
    q, k, v = jnp.split(qkv, 3, axis=-1)
    w = jnp.einsum("bthc,bshc->bhts", q * scale, k * scale)
    w = jax.nn.softmax(w, axis=-1)
    out = jnp.einsum("bhts,bshc->bthc", w, v).reshape(bs, n_ctx, W)
    out = out @ p["w_proj"] + p["b_proj"][0]
    x1 = x + out

    h2 = ln(x1, p["ln2_g"][0], p["ln2_b"][0])
    ff = jax.nn.gelu(h2 @ p["w_fc"] + p["b_fc"][0], approximate=False)
    ff = ff @ p["w_out"] + p["b_out"][0]
    return x1 + ff


# ---------------------------------------------------------------------------
# Main
# ---------------------------------------------------------------------------
if __name__ == "__main__":
    # Small but tiling-exercising shapes: 2 batches, 256 ctx, width 128, 4 heads
    # -> 2 query tiles x 2 kv tiles per batch (multi-step online softmax).
    bs, n_ctx, width, heads = 2, 256, 128, 4
    init_scale = 1.0
    key = jax.random.PRNGKey(0)
    keys = jax.random.split(key, 8)

    std = init_scale * math.sqrt(1.0 / width)   # init_linear-style normal init
    params = {
        # LayerNorm 1 / 2
        "ln1_g": jnp.ones((1, width), jnp.float32),
        "ln1_b": jnp.zeros((1, width), jnp.float32),
        "ln2_g": jnp.ones((1, width), jnp.float32),
        "ln2_b": jnp.zeros((1, width), jnp.float32),
        # c_qkv: Linear(width, 3*width), pre-transposed to (width, 3*width),
        # torch-interleaved per-head [q|k|v] column layout.
        "w_qkv": jax.random.normal(keys[0], (width, 3 * width), jnp.float32) * std,
        "b_qkv": jnp.zeros((1, 3 * width), jnp.float32),
        # c_proj: Linear(width, width)
        "w_proj": jax.random.normal(keys[1], (width, width), jnp.float32) * std,
        "b_proj": jnp.zeros((1, width), jnp.float32),
        # MLP: Linear(width, 4*width) -> GELU -> Linear(4*width, width)
        "w_fc": jax.random.normal(keys[2], (width, 4 * width), jnp.float32) * std,
        "b_fc": jnp.zeros((1, 4 * width), jnp.float32),
        "w_out": jax.random.normal(keys[3], (4 * width, width), jnp.float32)
                 * (init_scale * math.sqrt(1.0 / (4 * width))),
        "b_out": jnp.zeros((1, width), jnp.float32),
    }

    x = jax.random.normal(keys[4], (bs, n_ctx, width), jnp.float32)

    out = residual_attention_block(x, params, heads=heads,
                                   block_q=128, block_kv=128, block_rows=128)
    out = jax.block_until_ready(out)

    ref = _reference(x, params, heads)
    assert out.shape == (bs, n_ctx, width)
    # Tolerance allows the approximate (EUP) reciprocal used for softmax
    # normalization; structural/layout bugs would show up orders larger.
    max_err = float(jnp.max(jnp.abs(out - ref)))
    assert jnp.allclose(out, ref, atol=2e-3, rtol=2e-3), \
        f"mismatch vs reference (max abs err {max_err})"

    print("KERNEL_OK")
</pallas_src>

<mosaic_0001>
module attributes {stable_mosaic.version = 11 : i64} {
  func.func @_ln1_qkv_kernel(%arg0: i32, %arg1: i32, %arg2: memref<1x128x128xf32, #tpu.memory_space<vmem>>, %arg3: memref<1x128xf32, #tpu.memory_space<vmem>>, %arg4: memref<1x128xf32, #tpu.memory_space<vmem>>, %arg5: memref<128x384xf32, #tpu.memory_space<vmem>>, %arg6: memref<1x384xf32, #tpu.memory_space<vmem>>, %arg7: memref<1x128x128xf32, #tpu.memory_space<vmem>>, %arg8: memref<1x128x128xf32, #tpu.memory_space<vmem>>, %arg9: memref<1x128x128xf32, #tpu.memory_space<vmem>>) attributes {dimension_semantics = [#tpu.dimension_semantics<parallel>, #tpu.dimension_semantics<parallel>], iteration_bounds = array<i64: 2, 2>, scalar_prefetch = 0 : i64, scratch_operands = 0 : i64, tpu.core_type = #tpu.core_type<tc>, window_params = [{transform_indices = @transform_0, window_bounds = array<i64: 1, 128, 128>}, {pipeline_mode = #tpu.pipeline_mode<synchronous>, transform_indices = @transform_1, window_bounds = array<i64: 1, 128>}, {pipeline_mode = #tpu.pipeline_mode<synchronous>, transform_indices = @transform_2, window_bounds = array<i64: 1, 128>}, {pipeline_mode = #tpu.pipeline_mode<synchronous>, transform_indices = @transform_3, window_bounds = array<i64: 128, 384>}, {pipeline_mode = #tpu.pipeline_mode<synchronous>, transform_indices = @transform_4, window_bounds = array<i64: 1, 384>}, {transform_indices = @transform_5, window_bounds = array<i64: 1, 128, 128>}, {transform_indices = @transform_6, window_bounds = array<i64: 1, 128, 128>}, {transform_indices = @transform_7, window_bounds = array<i64: 1, 128, 128>}]} {
    %c0 = arith.constant 0 : index
    %c0_0 = arith.constant 0 : index
    %c0_1 = arith.constant 0 : index
    %0 = vector.load %arg2[%c0, %c0_0, %c0_1] : memref<1x128x128xf32, #tpu.memory_space<vmem>>, vector<1x128x128xf32>
    %1 = vector.shape_cast %0 : vector<1x128x128xf32> to vector<128x128xf32>
    %c0_2 = arith.constant 0 : index
    %c0_3 = arith.constant 0 : index
    %2 = vector.load %arg3[%c0_2, %c0_3] : memref<1x128xf32, #tpu.memory_space<vmem>>, vector<1x128xf32>
    %c0_4 = arith.constant 0 : index
    %c0_5 = arith.constant 0 : index
    %3 = vector.load %arg4[%c0_4, %c0_5] : memref<1x128xf32, #tpu.memory_space<vmem>>, vector<1x128xf32>
    %cst = arith.constant dense<0.000000e+00> : vector<128xf32>
    %4 = vector.multi_reduction <add>, %1, %cst [1] : vector<128x128xf32> to vector<128xf32>
    %5 = vector.shape_cast %4 : vector<128xf32> to vector<128x1xf32>
    %cst_6 = arith.constant 1.280000e+02 : f32
    %6 = vector.broadcast %cst_6 : f32 to vector<128x1xf32>
    %7 = arith.divf %5, %6 : vector<128x1xf32>
    %8 = vector.broadcast %7 : vector<128x1xf32> to vector<128x128xf32>
    %9 = arith.subf %1, %8 : vector<128x128xf32>
    %10 = arith.mulf %9, %9 : vector<128x128xf32>
    %cst_7 = arith.constant dense<0.000000e+00> : vector<128xf32>
    %11 = vector.multi_reduction <add>, %10, %cst_7 [1] : vector<128x128xf32> to vector<128xf32>
    %12 = vector.shape_cast %11 : vector<128xf32> to vector<128x1xf32>
    %cst_8 = arith.constant 1.280000e+02 : f32
    %13 = vector.broadcast %cst_8 : f32 to vector<128x1xf32>
    %14 = arith.divf %12, %13 : vector<128x1xf32>
    %15 = vector.broadcast %7 : vector<128x1xf32> to vector<128x128xf32>
    %16 = arith.subf %1, %15 : vector<128x128xf32>
    %cst_9 = arith.constant 9.99999974E-6 : f32
    %17 = vector.broadcast %cst_9 : f32 to vector<128x1xf32>
    %18 = arith.addf %14, %17 : vector<128x1xf32>
    %19 = math.rsqrt %18 : vector<128x1xf32>
    %20 = vector.broadcast %19 : vector<128x1xf32> to vector<128x128xf32>
    %21 = arith.mulf %16, %20 : vector<128x128xf32>
    %22 = vector.broadcast %2 : vector<1x128xf32> to vector<128x128xf32>
    %23 = arith.mulf %21, %22 : vector<128x128xf32>
    %24 = vector.broadcast %3 : vector<1x128xf32> to vector<128x128xf32>
    %25 = arith.addf %23, %24 : vector<128x128xf32>
    %c0_10 = arith.constant 0 : index
    %c0_11 = arith.constant 0 : index
    %26 = vector.load %arg5[%c0_10, %c0_11] : memref<128x384xf32, #tpu.memory_space<vmem>>, vector<128x384xf32>
    %cst_12 = arith.constant dense<0.000000e+00> : vector<128x384xf32>
    %27 = tpu.matmul %25, %26, %cst_12 {dimension_numbers = #tpu.dot_dimension_numbers<[1], [0], [0], [1], [0, 0, 1, 1], [], []>} : vector<128x128xf32>, vector<128x384xf32>, vector<128x384xf32> -> vector<128x384xf32>
    %c0_13 = arith.constant 0 : index
    %c0_14 = arith.constant 0 : index
    %28 = vector.load %arg6[%c0_13, %c0_14] : memref<1x384xf32, #tpu.memory_space<vmem>>, vector<1x384xf32>
    %29 = vector.broadcast %28 : vector<1x384xf32> to vector<128x384xf32>
    %30 = arith.addf %27, %29 : vector<128x384xf32>
    %31 = vector.extract_strided_slice %30 {offsets = [0, 0], sizes = [128, 128], strides = [1, 1]} : vector<128x384xf32> to vector<128x128xf32>
    %c0_15 = arith.constant 0 : index
    %c0_16 = arith.constant 0 : index
    %c0_17 = arith.constant 0 : index
    %32 = vector.load %arg7[%c0_15, %c0_16, %c0_17] : memref<1x128x128xf32, #tpu.memory_space<vmem>>, vector<1x128x128xf32>
    %33 = vector.shape_cast %32 : vector<1x128x128xf32> to vector<128x128xf32>
    %34 = vector.shape_cast %31 : vector<128x128xf32> to vector<1x128x128xf32>
    tpu.vector_store %arg7[%c0_15, %c0_16, %c0_17], %34 {strides = array<i32>} : memref<1x128x128xf32, #tpu.memory_space<vmem>>, vector<1x128x128xf32>,
    %35 = vector.extract_strided_slice %30 {offsets = [0, 128], sizes = [128, 128], strides = [1, 1]} : vector<128x384xf32> to vector<128x128xf32>
    %c0_18 = arith.constant 0 : index
    %c0_19 = arith.constant 0 : index
    %c0_20 = arith.constant 0 : index
    %36 = vector.load %arg8[%c0_18, %c0_19, %c0_20] : memref<1x128x128xf32, #tpu.memory_space<vmem>>, vector<1x128x128xf32>
    %37 = vector.shape_cast %36 : vector<1x128x128xf32> to vector<128x128xf32>
    %38 = vector.shape_cast %35 : vector<128x128xf32> to vector<1x128x128xf32>
    tpu.vector_store %arg8[%c0_18, %c0_19, %c0_20], %38 {strides = array<i32>} : memref<1x128x128xf32, #tpu.memory_space<vmem>>, vector<1x128x128xf32>,
    %39 = vector.extract_strided_slice %30 {offsets = [0, 256], sizes = [128, 128], strides = [1, 1]} : vector<128x384xf32> to vector<128x128xf32>
    %c0_21 = arith.constant 0 : index
    %c0_22 = arith.constant 0 : index
    %c0_23 = arith.constant 0 : index
    %40 = vector.load %arg9[%c0_21, %c0_22, %c0_23] : memref<1x128x128xf32, #tpu.memory_space<vmem>>, vector<1x128x128xf32>
    %41 = vector.shape_cast %40 : vector<1x128x128xf32> to vector<128x128xf32>
    %42 = vector.shape_cast %39 : vector<128x128xf32> to vector<1x128x128xf32>
    tpu.vector_store %arg9[%c0_21, %c0_22, %c0_23], %42 {strides = array<i32>} : memref<1x128x128xf32, #tpu.memory_space<vmem>>, vector<1x128x128xf32>,
    return
  }
  func.func @transform_0(%arg0: i32, %arg1: i32) -> (i32, i32, i32) {
    %c0_i32 = arith.constant 0 : i32
    %c0_i32_0 = arith.constant 0 : i32
    return %arg0, %arg1, %c0_i32 : i32, i32, i32
  }
  func.func @transform_1(%arg0: i32, %arg1: i32) -> (i32, i32) {
    %c0_i32 = arith.constant 0 : i32
    %c0_i32_0 = arith.constant 0 : i32
    %c0_i32_1 = arith.constant 0 : i32
    return %c0_i32, %c0_i32_0 : i32, i32
  }
  func.func @transform_2(%arg0: i32, %arg1: i32) -> (i32, i32) {
    %c0_i32 = arith.constant 0 : i32
    %c0_i32_0 = arith.constant 0 : i32
    %c0_i32_1 = arith.constant 0 : i32
    return %c0_i32, %c0_i32_0 : i32, i32
  }
  func.func @transform_3(%arg0: i32, %arg1: i32) -> (i32, i32) {
    %c0_i32 = arith.constant 0 : i32
    %c0_i32_0 = arith.constant 0 : i32
    %c0_i32_1 = arith.constant 0 : i32
    return %c0_i32, %c0_i32_0 : i32, i32
  }
  func.func @transform_4(%arg0: i32, %arg1: i32) -> (i32, i32) {
    %c0_i32 = arith.constant 0 : i32
    %c0_i32_0 = arith.constant 0 : i32
    %c0_i32_1 = arith.constant 0 : i32
    return %c0_i32, %c0_i32_0 : i32, i32
  }
  func.func @transform_5(%arg0: i32, %arg1: i32) -> (i32, i32, i32) {
    %c0_i32 = arith.constant 0 : i32
    %c0_i32_0 = arith.constant 0 : i32
    return %arg0, %arg1, %c0_i32 : i32, i32, i32
  }
  func.func @transform_6(%arg0: i32, %arg1: i32) -> (i32, i32, i32) {
    %c0_i32 = arith.constant 0 : i32
    %c0_i32_0 = arith.constant 0 : i32
    return %arg0, %arg1, %c0_i32 : i32, i32, i32
  }
  func.func @transform_7(%arg0: i32, %arg1: i32) -> (i32, i32, i32) {
    %c0_i32 = arith.constant 0 : i32
    %c0_i32_0 = arith.constant 0 : i32
    return %arg0, %arg1, %c0_i32 : i32, i32, i32
  }
}

</mosaic_0001>

<llo_original>
// kernel: tpu_custom_call.1
$region0: #{tpu_custom_call.1}
  #allocation0 [shape = 'u32[]', space=smem, size = 0x4, offset = 0x4, fixed_abs, tag = 'smem constant byte address 0x4 - core index']
  #allocation1 [shape = 'u32[72,128]{1,0:T(1,128)}', space=vmem, size = 0x9000, scoped, tag = 'internal scratch']
  %s0 = inlined_call_operand.hbm [shape: f32[2,256,128], index: 0, kind: input, shape index: {}]
  %s1 = inlined_call_operand.hbm [shape: f32[1,128], index: 1, kind: input, shape index: {}]
  %s2 = inlined_call_operand.hbm [shape: f32[1,128], index: 2, kind: input, shape index: {}]
  %s3 = inlined_call_operand.hbm [shape: f32[128,384], index: 3, kind: input, shape index: {}]
  %s4 = inlined_call_operand.vmem [shape: f32[1,384], index: 4, kind: input, shape index: {}]
  %s5 = inlined_call_operand.hbm [shape: f32[2,256,128], index: 5, kind: output, shape index: {0}]
  %s6 = inlined_call_operand.hbm [shape: f32[2,256,128], index: 6, kind: output, shape index: {1}]
  %s7 = inlined_call_operand.hbm [shape: f32[2,256,128], index: 7, kind: output, shape index: {2}]
  %8 = xla_tuple %s5, %s6, %s7
  %s9 = sld [smem:[#allocation0]]
  $region85: #{tpu_custom_call.1} parent=0
    _
  %s11 = ssub.s32 1, %s9
  %s12 = scalar_select 0, %s11, %s9
  $region1: #{tpu_custom_call.1} parent=0
    #allocation2 [shape = 'u8[131072]{0}', space=vmem, size = 0x20000, scoped, tag = 'input window, operand 0']
    #allocation3 [shape = 's32[2]{0}', space=sflag, size = 0x8, scoped, tag = 'scoped memory for tpu_custom_call.1']
    #allocation4 [shape = 's32[2]{0}', space=sflag, size = 0x8, scoped, tag = 'scoped memory for tpu_custom_call.1']
    #allocation5 [shape = 'u8[512]{0}', space=vmem, size = 0x400, scoped, tag = 'input window, operand 1, single buffered']
    #allocation6 [shape = 's32[1]{0}', space=sflag, size = 0x4, scoped, tag = 'scoped memory for tpu_custom_call.1']
    #allocation7 [shape = 'u8[512]{0}', space=vmem, size = 0x400, scoped, tag = 'input window, operand 2, single buffered']
    #allocation8 [shape = 'u8[196608]{0}', space=vmem, size = 0x30000, scoped, tag = 'input window, operand 3, single buffered']
    #allocation9 [shape = 's32[1]{0}', space=sflag, size = 0x4, scoped, tag = 'scoped memory for tpu_custom_call.1']
    #allocation10 [shape = 'u8[131072]{0}', space=vmem, size = 0x20000, scoped, tag = 'output window, operand 0']
    #allocation11 [shape = 'u8[131072]{0}', space=vmem, size = 0x20000, scoped, tag = 'output window, operand 1']
    #allocation12 [shape = 's32[2]{0}', space=sflag, size = 0x8, scoped, tag = 'scoped memory for tpu_custom_call.1']
    #allocation13 [shape = 'u8[131072]{0}', space=vmem, size = 0x20000, scoped, tag = 'output window, operand 2']
    %13 = vsyncpa [#allocation3], 0
    %s14 = scalar_lea.sflag [#allocation3], 1
    %15 = vsyncpa %s14, 0
    %16 = vsyncpa [#allocation6], 0
    %17 = vsyncpa [#allocation9], 0
    %18 = vsyncpa [#allocation4], 0
    %s19 = scalar_lea.sflag [#allocation4], 1
    %20 = vsyncpa %s19, 0
    %21 = vsyncpa [#allocation12], 0
    %s22 = scalar_lea.sflag [#allocation12], 1
    %23 = vsyncpa %s22, 0
    loop: start=0, step=1, limit=6
    $region2: #{tpu_custom_call.1} parent=1 // loop_pre_header
      _
    $region3: #{tpu_custom_call.1} parent=1 // loop_header
      %s25 = sphi 0, %s29
      %p26 = scmp.ge.s32.totalorder %s25, 6
      %s32 = sphi 0, %s44
      %s33 = sphi 0, %s40
      %s34 = sphi 0, %s32
      %s35 = sphi 0, %s33
      %s36 = sphi 0, %s34
      %s37 = sphi 0, %s35
      %s49 = sphi 0, %s51
      %s52 = sphi 0, %s49
      %s53 = sphi 0, %s52
      %s69 = sphi 0, %s53
      %s73 = sphi 0, %s73
      %s75 = sphi 0, %s73
      %s76 = sphi 0, %s75
      %s90 = sphi 0, %s76
      %s94 = sphi 0, %s94
      %s96 = sphi 0, %s94
      %s97 = sphi 0, %s96
      %s111 = sphi 0, %s97
      %s115 = sphi 0, %s115
      %s117 = sphi 0, %s115
      %s118 = sphi 0, %s117
      %s132 = sphi 0, %s118
      %s136 = sphi 0, %s136
      %s138 = sphi 0, %s136
      %s139 = sphi 0, %s138
      %s153 = sphi 0, %s139
      %s161 = sphi 0, %s163
      %s164 = sphi 0, %s161
      %s165 = sphi 0, %s164
      %s181 = sphi 0, %s165
      %s189 = sphi 0, %s191
      %s192 = sphi 0, %s189
      %s193 = sphi 0, %s192
      %s209 = sphi 0, %s193
      %s217 = sphi 0, %s219
      %s220 = sphi 0, %s217
      %s221 = sphi 0, %s220
      %s237 = sphi 0, %s221
    $region4: #{tpu_custom_call.1} parent=1 // loop_header_branch
      %28 = sbr.rel (%p26) target = $region8
    $region5: #{tpu_custom_call.1} parent=1 // loop_body
      %s30 = ssub.s32 %s25, 1
      %s31 = ssub.s32 %s25, 2
      %s38 = sadd.s32 1, %s33
      %p39 = scmp.ge.s32.totalorder %s38, 2
      %s40 = scalar_select %p39, 0, %s38
      %s41 = sadd.s32 1, %s32
      %s42 = scalar_select %p39, %s41, %s32
      %p43 = scmp.ge.s32.totalorder %s42, 2
      %s44 = scalar_select %p43, 0, %s42
      %s45 = ssub.s32 %s32, %s44
      %s46 = ssub.s32 %s33, %s40
      %s47 = sor.u32 %s45, %s46
      %p48 = scmp.eq.s32.totalorder %s47, 0
      %s50 = sadd.s32 %s49, 1
      %s51 = scalar_select %p48, %s49, %s50
      %p54 = pneg %p48
      %p55 = scmp.eq.s32.totalorder %s25, 3
      %p56 = por %p54, %p55
      %p57 = scmp.ne.s32.totalorder %s49, %s52
      %p58 = scmp.eq.s32.totalorder %s25, 0
      %p59 = por %p57, %p58
      %p60 = scmp.ne.s32.totalorder %s49, %s52
      %p61 = scmp.eq.s32.totalorder %s30, 3
      %p62 = por %p60, %p61
      %p63 = scmp.ne.s32.totalorder %s52, %s53
      %p64 = scmp.eq.s32.totalorder %s30, 0
      %p65 = por %p63, %p64
      %p66 = scmp.ne.s32.totalorder %s52, %s53
      %p67 = scmp.eq.s32.totalorder %s31, 3
      %p68 = por %p66, %p67
      %p70 = scmp.ne.s32.totalorder %s53, %s69
      %p71 = scmp.eq.s32.totalorder %s31, 0
      %p72 = por %p70, %p71
      %s74 = sadd.s32 %s73, 1
      %p77 = scmp.eq.s32.totalorder %s25, 3
      %p78 = scmp.ne.s32.totalorder %s73, %s75
      %p79 = scmp.eq.s32.totalorder %s25, 0
      %p80 = por %p78, %p79
      %p81 = scmp.ne.s32.totalorder %s73, %s75
      %p82 = scmp.eq.s32.totalorder %s30, 3
      %p83 = por %p81, %p82
      %p84 = scmp.ne.s32.totalorder %s75, %s76
      %p85 = scmp.eq.s32.totalorder %s30, 0
      %p86 = por %p84, %p85
      %p87 = scmp.ne.s32.totalorder %s75, %s76
      %p88 = scmp.eq.s32.totalorder %s31, 3
      %p89 = por %p87, %p88
      %p91 = scmp.ne.s32.totalorder %s76, %s90
      %p92 = scmp.eq.s32.totalorder %s31, 0
      %p93 = por %p91, %p92
      %s95 = sadd.s32 %s94, 1
      %p98 = scmp.eq.s32.totalorder %s25, 3
      %p99 = scmp.ne.s32.totalorder %s94, %s96
      %p100 = scmp.eq.s32.totalorder %s25, 0
      %p101 = por %p99, %p100
      %p102 = scmp.ne.s32.totalorder %s94, %s96
      %p103 = scmp.eq.s32.totalorder %s30, 3
      %p104 = por %p102, %p103
      %p105 = scmp.ne.s32.totalorder %s96, %s97
      %p106 = scmp.eq.s32.totalorder %s30, 0
      %p107 = por %p105, %p106
      %p108 = scmp.ne.s32.totalorder %s96, %s97
      %p109 = scmp.eq.s32.totalorder %s31, 3
      %p110 = por %p108, %p109
      %p112 = scmp.ne.s32.totalorder %s97, %s111
      %p113 = scmp.eq.s32.totalorder %s31, 0
      %p114 = por %p112, %p113
      %s116 = sadd.s32 %s115, 1
      %p119 = scmp.eq.s32.totalorder %s25, 3
      %p120 = scmp.ne.s32.totalorder %s115, %s117
      %p121 = scmp.eq.s32.totalorder %s25, 0
      %p122 = por %p120, %p121
      %p123 = scmp.ne.s32.totalorder %s115, %s117
      %p124 = scmp.eq.s32.totalorder %s30, 3
      %p125 = por %p123, %p124
      %p126 = scmp.ne.s32.totalorder %s117, %s118
      %p127 = scmp.eq.s32.totalorder %s30, 0
      %p128 = por %p126, %p127
      %p129 = scmp.ne.s32.totalorder %s117, %s118
      %p130 = scmp.eq.s32.totalorder %s31, 3
      %p131 = por %p129, %p130
      %p133 = scmp.ne.s32.totalorder %s118, %s132
      %p134 = scmp.eq.s32.totalorder %s31, 0
      %p135 = por %p133, %p134
      %s137 = sadd.s32 %s136, 1
      %p140 = scmp.eq.s32.totalorder %s25, 3
      %p141 = scmp.ne.s32.totalorder %s136, %s138
      %p142 = scmp.eq.s32.totalorder %s25, 0
      %p143 = por %p141, %p142
      %p144 = scmp.ne.s32.totalorder %s136, %s138
      %p145 = scmp.eq.s32.totalorder %s30, 3
      %p146 = por %p144, %p145
      %p147 = scmp.ne.s32.totalorder %s138, %s139
      %p148 = scmp.eq.s32.totalorder %s30, 0
      %p149 = por %p147, %p148
      %p150 = scmp.ne.s32.totalorder %s138, %s139
      %p151 = scmp.eq.s32.totalorder %s31, 3
      %p152 = por %p150, %p151
      %p154 = scmp.ne.s32.totalorder %s139, %s153
      %p155 = scmp.eq.s32.totalorder %s31, 0
      %p156 = por %p154, %p155
      %s157 = ssub.s32 %s32, %s44
      %s158 = ssub.s32 %s33, %s40
      %s159 = sor.u32 %s157, %s158
      %p160 = scmp.eq.s32.totalorder %s159, 0
      %s162 = sadd.s32 %s161, 1
      %s163 = scalar_select %p160, %s161, %s162
      %p166 = pneg %p160
      %p167 = scmp.eq.s32.totalorder %s25, 3
      %p168 = por %p166, %p167
      %p169 = scmp.ne.s32.totalorder %s161, %s164
      %p170 = scmp.eq.s32.totalorder %s25, 0
      %p171 = por %p169, %p170
      %p172 = scmp.ne.s32.totalorder %s161, %s164
      %p173 = scmp.eq.s32.totalorder %s30, 3
      %p174 = por %p172, %p173
      %p175 = scmp.ne.s32.totalorder %s164, %s165
      %p176 = scmp.eq.s32.totalorder %s30, 0
      %p177 = por %p175, %p176
      %p178 = scmp.ne.s32.totalorder %s164, %s165
      %p179 = scmp.eq.s32.totalorder %s31, 3
      %p180 = por %p178, %p179
      %p182 = scmp.ne.s32.totalorder %s165, %s181
      %p183 = scmp.eq.s32.totalorder %s31, 0
      %p184 = por %p182, %p183
      %s185 = ssub.s32 %s32, %s44
      %s186 = ssub.s32 %s33, %s40
      %s187 = sor.u32 %s185, %s186
      %p188 = scmp.eq.s32.totalorder %s187, 0
      %s190 = sadd.s32 %s189, 1
      %s191 = scalar_select %p188, %s189, %s190
      %p194 = pneg %p188
      %p195 = scmp.eq.s32.totalorder %s25, 3
      %p196 = por %p194, %p195
      %p197 = scmp.ne.s32.totalorder %s189, %s192
      %p198 = scmp.eq.s32.totalorder %s25, 0
      %p199 = por %p197, %p198
      %p200 = scmp.ne.s32.totalorder %s189, %s192
      %p201 = scmp.eq.s32.totalorder %s30, 3
      %p202 = por %p200, %p201
      %p203 = scmp.ne.s32.totalorder %s192, %s193
      %p204 = scmp.eq.s32.totalorder %s30, 0
      %p205 = por %p203, %p204
      %p206 = scmp.ne.s32.totalorder %s192, %s193
      %p207 = scmp.eq.s32.totalorder %s31, 3
      %p208 = por %p206, %p207
      %p210 = scmp.ne.s32.totalorder %s193, %s209
      %p211 = scmp.eq.s32.totalorder %s31, 0
      %p212 = por %p210, %p211
      %s213 = ssub.s32 %s32, %s44
      %s214 = ssub.s32 %s33, %s40
      %s215 = sor.u32 %s213, %s214
      %p216 = scmp.eq.s32.totalorder %s215, 0
      %s218 = sadd.s32 %s217, 1
      %s219 = scalar_select %p216, %s217, %s218
      %p222 = pneg %p216
      %p223 = scmp.eq.s32.totalorder %s25, 3
      %p224 = por %p222, %p223
      %p225 = scmp.ne.s32.totalorder %s217, %s220
      %p226 = scmp.eq.s32.totalorder %s25, 0
      %p227 = por %p225, %p226
      %p228 = scmp.ne.s32.totalorder %s217, %s220
      %p229 = scmp.eq.s32.totalorder %s30, 3
      %p230 = por %p228, %p229
      %p231 = scmp.ne.s32.totalorder %s220, %s221
      %p232 = scmp.eq.s32.totalorder %s30, 0
      %p233 = por %p231, %p232
      %p234 = scmp.ne.s32.totalorder %s220, %s221
      %p235 = scmp.eq.s32.totalorder %s31, 3
      %p236 = por %p234, %p235
      %p238 = scmp.ne.s32.totalorder %s221, %s237
      %p239 = scmp.eq.s32.totalorder %s31, 0
      %p240 = por %p238, %p239
      %p241 = scmp.le.s32.totalorder 1, %s25
      %p242 = scmp.lt.s32.totalorder %s25, 5
      %p243 = pnand %p241, %p242
      %p244 = pneg %p243
      // Predicated region
      $region9: #{tpu_custom_call.1} parent=5 // pred_check
        _
      $region10: #{tpu_custom_call.1} parent=5 // pred_check_branch
        %246 = sbr.rel (%p243) target = $region12
      $region11: #{tpu_custom_call.1} parent=5 // pred_region
        %s247 = ssub.s32 %s25, 1
        // Predicated region
        $region13: #{tpu_custom_call.1} parent=11 // pred_check
          %p248 = pneg %p86
        $region14: #{tpu_custom_call.1} parent=11 // pred_check_branch
          %250 = sbr.rel (%p248) target = $region16
        $region15: #{tpu_custom_call.1} parent=11 // pred_region
          %252 = vsyncadd [#allocation6], 0
          %s254 = sshll.u32 %s1, 4
          %s255 = int_to_ptr.hbm [resolvable:$true] %s254
          %s256 = sshll.u32 [#allocation5], 4
          %s257 = int_to_ptr.vmem [resolvable:$true] %s256
          %259 = dma.hbm_to_vmem [thread:$0]  %s255, 16, %s257, [#allocation6]
        $region16: #{tpu_custom_call.1} parent=11 // pred_fallthru
          _
        // Predicated region
        $region17: #{tpu_custom_call.1} parent=11 // pred_check
          %p260 = pneg %p107
        $region18: #{tpu_custom_call.1} parent=11 // pred_check_branch
          %262 = sbr.rel (%p260) target = $region20
        $region19: #{tpu_custom_call.1} parent=11 // pred_region
          %264 = vsyncadd [#allocation6], 0
          %s266 = sshll.u32 %s2, 4
          %s267 = int_to_ptr.hbm [resolvable:$true] %s266
          %s268 = sshll.u32 [#allocation7], 4
          %s269 = int_to_ptr.vmem [resolvable:$true] %s268
          %271 = dma.hbm_to_vmem [thread:$0]  %s267, 16, %s269, [#allocation6]
        $region20: #{tpu_custom_call.1} parent=11 // pred_fallthru
          _
        // Predicated region
        $region21: #{tpu_custom_call.1} parent=11 // pred_check
          %p272 = pneg %p128
        $region22: #{tpu_custom_call.1} parent=11 // pred_check_branch
          %274 = sbr.rel (%p272) target = $region24
        $region23: #{tpu_custom_call.1} parent=11 // pred_region
          %276 = vsyncadd [#allocation9], 0
          %s277 = sshll.u32 %s3, 4
          %s278 = int_to_ptr.hbm [resolvable:$true] %s277
          %s279 = sshll.u32 [#allocation8], 4
          %s280 = int_to_ptr.vmem [resolvable:$true] %s279
          %285 = dma.hbm_to_vmem [thread:$0]  %s278, 6144, %s280, [#allocation9], 384, 384, 24
        $region24: #{tpu_custom_call.1} parent=11 // pred_fallthru
          _
        // Predicated region
        $region25: #{tpu_custom_call.1} parent=11 // pred_check
          %p286 = pneg %p149
        $region26: #{tpu_custom_call.1} parent=11 // pred_check_branch
          %288 = sbr.rel (%p286) target = $region28
        $region27: #{tpu_custom_call.1} parent=11 // pred_region
          _
        $region28: #{tpu_custom_call.1} parent=11 // pred_fallthru
          _
      $region12: #{tpu_custom_call.1} parent=5 // pred_fallthru
        _
      %p289 = scmp.lt.s32.totalorder %s25, 4
      // Predicated region
      $region29: #{tpu_custom_call.1} parent=5 // pred_check
        %p290 = pneg %p289
      $region30: #{tpu_custom_call.1} parent=5 // pred_check_branch
        %292 = sbr.rel (%p290) target = $region32
      $region31: #{tpu_custom_call.1} parent=5 // pred_region
        // Predicated region
        $region33: #{tpu_custom_call.1} parent=31 // pred_check
          %p293 = pneg %p59
        $region34: #{tpu_custom_call.1} parent=31 // pred_check_branch
          %295 = sbr.rel (%p293) target = $region36
        $region35: #{tpu_custom_call.1} parent=31 // pred_region
          %s296 = sand.u32 %s49, 1
          %s297 = scalar_lea.sflag [#allocation3], %s296
          %s298 = sand.u32 %s49, 1
          %s299 = smul.addr %s298, 128
          %s300 = scalar_lea.vmem [#allocation2], %s299
          %s301 = smul.u32 16, %s33
          %303 = vsyncadd %s297, 0
          %s304 = smul.addr %s32, 32
          %s305 = sadd.s32 %s301, %s304
          %s306 = smul.addr %s305, 8
          %s307 = scalar_lea.hbm %s0, %s306
          %s308 = sshll.u32 %s307, 4
          %s309 = int_to_ptr.hbm [resolvable:$true] %s308
          %s310 = sshll.u32 %s300, 4
          %s311 = int_to_ptr.vmem [resolvable:$true] %s310
          %316 = dma.hbm_to_vmem [thread:$0]  %s309, 2048, %s311, %s297, 128, 128, 8
        $region36: #{tpu_custom_call.1} parent=31 // pred_fallthru
          _
      $region32: #{tpu_custom_call.1} parent=5 // pred_fallthru
        _
      %p317 = scmp.le.s32.totalorder 1, %s25
      %p318 = scmp.lt.s32.totalorder %s25, 5
      %p319 = pnand %p317, %p318
      %p320 = pneg %p319
      // Predicated region
      $region37: #{tpu_custom_call.1} parent=5 // pred_check
        _
      $region38: #{tpu_custom_call.1} parent=5 // pred_check_branch
        %322 = sbr.rel (%p319) target = $region40
      $region39: #{tpu_custom_call.1} parent=5 // pred_region
        %s323 = ssub.s32 %s25, 1
        %s324 = sand.u32 %s52, 1
        %s325 = scalar_lea.sflag [#allocation3], %s324
        %s326 = sand.u32 %s52, 1
        %s327 = smul.addr %s326, 128
        %s328 = scalar_lea.vmem [#allocation2], %s327
        // Predicated region
        $region41: #{tpu_custom_call.1} parent=39 // pred_check
          %p329 = pneg %p65
        $region42: #{tpu_custom_call.1} parent=39 // pred_check_branch
          %331 = sbr.rel (%p329) target = $region44
        $region43: #{tpu_custom_call.1} parent=39 // pred_region
          %333 = dma.done %s325, 2048
        $region44: #{tpu_custom_call.1} parent=39 // pred_fallthru
          _
        // Predicated region
        $region45: #{tpu_custom_call.1} parent=39 // pred_check
          %p334 = pneg %p86
        $region46: #{tpu_custom_call.1} parent=39 // pred_check_branch
          %336 = sbr.rel (%p334) target = $region48
        $region47: #{tpu_custom_call.1} parent=39 // pred_region
          %338 = dma.done [#allocation6], 16
        $region48: #{tpu_custom_call.1} parent=39 // pred_fallthru
          _
        // Predicated region
        $region49: #{tpu_custom_call.1} parent=39 // pred_check
          %p339 = pneg %p107
        $region50: #{tpu_custom_call.1} parent=39 // pred_check_branch
          %341 = sbr.rel (%p339) target = $region52
        $region51: #{tpu_custom_call.1} parent=39 // pred_region
          %343 = dma.done [#allocation6], 16
        $region52: #{tpu_custom_call.1} parent=39 // pred_fallthru
          _
        // Predicated region
        $region53: #{tpu_custom_call.1} parent=39 // pred_check
          %p344 = pneg %p128
        $region54: #{tpu_custom_call.1} parent=39 // pred_check_branch
          %346 = sbr.rel (%p344) target = $region56
        $region55: #{tpu_custom_call.1} parent=39 // pred_region
          %348 = dma.done [#allocation9], 6144
        $region56: #{tpu_custom_call.1} parent=39 // pred_fallthru
          _
        %s349 = sand.u32 %s52, 1
        %s350 = scalar_lea.sflag [#allocation3], %s349
        %s351 = sand.u32 %s52, 1
        %s352 = smul.addr %s351, 128
        %s353 = scalar_lea.vmem [#allocation2], %s352
        %p354 = pneg %p65
        %p355 = pneg %p62
        %p356 = pneg %p86
        %p357 = pneg %p83
        %p358 = pneg %p107
        %p359 = pneg %p104
        %p360 = pneg %p128
        %p361 = pneg %p125
        %p362 = pneg %p149
        %p363 = pneg %p146
        %p364 = pneg %p177
        %p365 = pneg %p174
        %s366 = sand.u32 %s164, 1
        %s367 = scalar_lea.sflag [#allocation4], %s366
        %s368 = sand.u32 %s164, 1
        %s369 = smul.addr %s368, 128
        %s370 = scalar_lea.vmem [#allocation10], %s369
        %p371 = pneg %p205
        %p372 = pneg %p202
        %s373 = sand.u32 %s30, 1
        %s374 = scalar_lea.sflag [#allocation12], %s373
        %s375 = sand.u32 %s192, 1
        %s376 = smul.addr %s375, 128
        %s377 = scalar_lea.vmem [#allocation11], %s376
        %p378 = pneg %p233
        %p379 = pneg %p230
        %s380 = sand.u32 %s30, 1
        %s381 = scalar_lea.sflag [#allocation12], %s380
        %s382 = sand.u32 %s220, 1
        %s383 = smul.addr %s382, 128
        %s384 = scalar_lea.vmem [#allocation13], %s383
        %s385 = smul.u32 16, %s35
        %s386 = smul.u32 16, %s35
        %s387 = smul.u32 16, %s35
        %s388 = smul.u32 16, %s35
        %v389 = vld [vmem:[%s328] sm:$0xff]
        %v390 = vld [vmem:[%s328 + $0x8] sm:$0xff]
        %v391 = vld [vmem:[%s328 + $0x10] sm:$0xff]
        %v392 = vld [vmem:[%s328 + $0x18] sm:$0xff]
        %v393 = vld [vmem:[%s328 + $0x20] sm:$0xff]
        %v394 = vld [vmem:[%s328 + $0x28] sm:$0xff]
        %v395 = vld [vmem:[%s328 + $0x30] sm:$0xff]
        %v396 = vld [vmem:[%s328 + $0x38] sm:$0xff]
        %v397 = vld [vmem:[%s328 + $0x40] sm:$0xff]
        %v398 = vld [vmem:[%s328 + $0x48] sm:$0xff]
        %v399 = vld [vmem:[%s328 + $0x50] sm:$0xff]
        %v400 = vld [vmem:[%s328 + $0x58] sm:$0xff]
        %v401 = vld [vmem:[%s328 + $0x60] sm:$0xff]
        %v402 = vld [vmem:[%s328 + $0x68] sm:$0xff]
        %v403 = vld [vmem:[%s328 + $0x70] sm:$0xff]
        %v404 = vld [vmem:[%s328 + $0x78] sm:$0xff]
        %v405 = vld [vmem:[#allocation5] sm:$0x1]
        %v406 = vld [vmem:[#allocation7] sm:$0x1]
        %407 = vadd.xlane.f32.xlu0 %v389
        %v408 = vpop.xlane.xlu0 %407
        %409 = vadd.xlane.f32.xlu0 %v390
        %v410 = vpop.xlane.xlu0 %409
        %411 = vadd.xlane.f32.xlu0 %v391
        %v412 = vpop.xlane.xlu0 %411
        %413 = vadd.xlane.f32.xlu0 %v392
        %v414 = vpop.xlane.xlu0 %413
        %415 = vadd.xlane.f32.xlu0 %v393
        %v416 = vpop.xlane.xlu0 %415
        %417 = vadd.xlane.f32.xlu0 %v394
        %v418 = vpop.xlane.xlu0 %417
        %419 = vadd.xlane.f32.xlu0 %v395
        %v420 = vpop.xlane.xlu0 %419
        %421 = vadd.xlane.f32.xlu0 %v396
        %v422 = vpop.xlane.xlu0 %421
        %423 = vadd.xlane.f32.xlu0 %v397
        %v424 = vpop.xlane.xlu0 %423
        %425 = vadd.xlane.f32.xlu0 %v398
        %v426 = vpop.xlane.xlu0 %425
        %427 = vadd.xlane.f32.xlu0 %v399
        %v428 = vpop.xlane.xlu0 %427
        %429 = vadd.xlane.f32.xlu0 %v400
        %v430 = vpop.xlane.xlu0 %429
        %431 = vadd.xlane.f32.xlu0 %v401
        %v432 = vpop.xlane.xlu0 %431
        %433 = vadd.xlane.f32.xlu0 %v402
        %v434 = vpop.xlane.xlu0 %433
        %435 = vadd.xlane.f32.xlu0 %v403
        %v436 = vpop.xlane.xlu0 %435
        %437 = vadd.xlane.f32.xlu0 %v404
        %v438 = vpop.xlane.xlu0 %437
        %v439 = vrcp.pop 128.0
        %v440 = vmul.f32 128.0, %v439
        %v441 = vsub.f32 1.0, %v440
        %v442 = vmul.f32 %v439, %v441
        %v443 = vadd.f32 %v439, %v442
        %vm444 = vweird.f32 %v439
        %v445 = vsel %vm444, %v439, %v443
        %v446 = vmul.f32 %v408, %v445
        %v447 = vmul.f32 %v410, %v445
        %v448 = vmul.f32 %v412, %v445
        %v449 = vmul.f32 %v414, %v445
        %v450 = vmul.f32 %v416, %v445
        %v451 = vmul.f32 %v418, %v445
        %v452 = vmul.f32 %v420, %v445
        %v453 = vmul.f32 %v422, %v445
        %v454 = vmul.f32 %v424, %v445
        %v455 = vmul.f32 %v426, %v445
        %v456 = vmul.f32 %v428, %v445
        %v457 = vmul.f32 %v430, %v445
        %v458 = vmul.f32 %v432, %v445
        %v459 = vmul.f32 %v434, %v445
        %v460 = vmul.f32 %v436, %v445
        %v461 = vmul.f32 %v438, %v445
        %v462 = vsub.f32 %v389, %v446
        %v463 = vsub.f32 %v390, %v447
        %v464 = vsub.f32 %v391, %v448
        %v465 = vsub.f32 %v392, %v449
        %v466 = vsub.f32 %v393, %v450
        %v467 = vsub.f32 %v394, %v451
        %v468 = vsub.f32 %v395, %v452
        %v469 = vsub.f32 %v396, %v453
        %v470 = vsub.f32 %v397, %v454
        %v471 = vsub.f32 %v398, %v455
        %v472 = vsub.f32 %v399, %v456
        %v473 = vsub.f32 %v400, %v457
        %v474 = vsub.f32 %v401, %v458
        %v475 = vsub.f32 %v402, %v459
        %v476 = vsub.f32 %v403, %v460
        %v477 = vsub.f32 %v404, %v461
        %v478 = vmul.f32 %v462, %v462
        %v479 = vmul.f32 %v463, %v463
        %v480 = vmul.f32 %v464, %v464
        %v481 = vmul.f32 %v465, %v465
        %v482 = vmul.f32 %v466, %v466
        %v483 = vmul.f32 %v467, %v467
        %v484 = vmul.f32 %v468, %v468
        %v485 = vmul.f32 %v469, %v469
        %v486 = vmul.f32 %v470, %v470
        %v487 = vmul.f32 %v471, %v471
        %v488 = vmul.f32 %v472, %v472
        %v489 = vmul.f32 %v473, %v473
        %v490 = vmul.f32 %v474, %v474
        %v491 = vmul.f32 %v475, %v475
        %v492 = vmul.f32 %v476, %v476
        %v493 = vmul.f32 %v477, %v477
        %494 = vadd.xlane.f32.xlu0 %v478
        %v495 = vpop.xlane.xlu0 %494
        %496 = vadd.xlane.f32.xlu0 %v479
        %v497 = vpop.xlane.xlu0 %496
        %498 = vadd.xlane.f32.xlu0 %v480
        %v499 = vpop.xlane.xlu0 %498
        %500 = vadd.xlane.f32.xlu0 %v481
        %v501 = vpop.xlane.xlu0 %500
        %502 = vadd.xlane.f32.xlu0 %v482
        %v503 = vpop.xlane.xlu0 %502
        %504 = vadd.xlane.f32.xlu0 %v483
        %v505 = vpop.xlane.xlu0 %504
        %506 = vadd.xlane.f32.xlu0 %v484
        %v507 = vpop.xlane.xlu0 %506
        %508 = vadd.xlane.f32.xlu0 %v485
        %v509 = vpop.xlane.xlu0 %508
        %510 = vadd.xlane.f32.xlu0 %v486
        %v511 = vpop.xlane.xlu0 %510
        %512 = vadd.xlane.f32.xlu0 %v487
        %v513 = vpop.xlane.xlu0 %512
        %514 = vadd.xlane.f32.xlu0 %v488
        %v515 = vpop.xlane.xlu0 %514
        %516 = vadd.xlane.f32.xlu0 %v489
        %v517 = vpop.xlane.xlu0 %516
        %518 = vadd.xlane.f32.xlu0 %v490
        %v519 = vpop.xlane.xlu0 %518
        %520 = vadd.xlane.f32.xlu0 %v491
        %v521 = vpop.xlane.xlu0 %520
        %522 = vadd.xlane.f32.xlu0 %v492
        %v523 = vpop.xlane.xlu0 %522
        %524 = vadd.xlane.f32.xlu0 %v493
        %v525 = vpop.xlane.xlu0 %524
        %v526 = vmul.f32 %v495, %v445
        %v527 = vmul.f32 %v497, %v445
        %v528 = vmul.f32 %v499, %v445
        %v529 = vmul.f32 %v501, %v445
        %v530 = vmul.f32 %v503, %v445
        %v531 = vmul.f32 %v505, %v445
        %v532 = vmul.f32 %v507, %v445
        %v533 = vmul.f32 %v509, %v445
        %v534 = vmul.f32 %v511, %v445
        %v535 = vmul.f32 %v513, %v445
        %v536 = vmul.f32 %v515, %v445
        %v537 = vmul.f32 %v517, %v445
        %v538 = vmul.f32 %v519, %v445
        %v539 = vmul.f32 %v521, %v445
        %v540 = vmul.f32 %v523, %v445
        %v541 = vmul.f32 %v525, %v445
        %v542 = vadd.f32 %v526, 1e-05
        %v543 = vadd.f32 %v527, 1e-05
        %v544 = vadd.f32 %v528, 1e-05
        %v545 = vadd.f32 %v529, 1e-05
        %v546 = vadd.f32 %v530, 1e-05
        %v547 = vadd.f32 %v531, 1e-05
        %v548 = vadd.f32 %v532, 1e-05
        %v549 = vadd.f32 %v533, 1e-05
        %v550 = vadd.f32 %v534, 1e-05
        %v551 = vadd.f32 %v535, 1e-05
        %v552 = vadd.f32 %v536, 1e-05
        %v553 = vadd.f32 %v537, 1e-05
        %v554 = vadd.f32 %v538, 1e-05
        %v555 = vadd.f32 %v539, 1e-05
        %v556 = vadd.f32 %v540, 1e-05
        %v557 = vadd.f32 %v541, 1e-05
        %v558 = vrsqrt.pop %v542
        %v559 = vmul.f32 %v558, %v542
        %v560 = vmul.f32 %v559, %v558
        %v561 = vmul.f32 0.5, %v560
        %v562 = vsub.f32 1.5, %v561
        %v563 = vmul.f32 %v558, %v562
        %vm564 = vweird.f32 %v542
        %vm565 = vweird.f32 %v558
        %vm566 = vmor %vm564, %vm565
        %v567 = vsel %vm566, %v558, %v563
        %v568 = vrsqrt.pop %v543
        %v569 = vmul.f32 %v568, %v543
        %v570 = vmul.f32 %v569, %v568
        %v571 = vmul.f32 0.5, %v570
        %v572 = vsub.f32 1.5, %v571
        %v573 = vmul.f32 %v568, %v572
        %vm574 = vweird.f32 %v543
        %vm575 = vweird.f32 %v568
        %vm576 = vmor %vm574, %vm575
        %v577 = vsel %vm576, %v568, %v573
        %v578 = vrsqrt.pop %v544
        %v579 = vmul.f32 %v578, %v544
        %v580 = vmul.f32 %v579, %v578
        %v581 = vmul.f32 0.5, %v580
        %v582 = vsub.f32 1.5, %v581
        %v583 = vmul.f32 %v578, %v582
        %vm584 = vweird.f32 %v544
        %vm585 = vweird.f32 %v578
        %vm586 = vmor %vm584, %vm585
        %v587 = vsel %vm586, %v578, %v583
        %v588 = vrsqrt.pop %v545
        %v589 = vmul.f32 %v588, %v545
        %v590 = vmul.f32 %v589, %v588
        %v591 = vmul.f32 0.5, %v590
        %v592 = vsub.f32 1.5, %v591
        %v593 = vmul.f32 %v588, %v592
        %vm594 = vweird.f32 %v545
        %vm595 = vweird.f32 %v588
        %vm596 = vmor %vm594, %vm595
        %v597 = vsel %vm596, %v588, %v593
        %v598 = vrsqrt.pop %v546
        %v599 = vmul.f32 %v598, %v546
        %v600 = vmul.f32 %v599, %v598
        %v601 = vmul.f32 0.5, %v600
        %v602 = vsub.f32 1.5, %v601
        %v603 = vmul.f32 %v598, %v602
        %vm604 = vweird.f32 %v546
        %vm605 = vweird.f32 %v598
        %vm606 = vmor %vm604, %vm605
        %v607 = vsel %vm606, %v598, %v603
        %v608 = vrsqrt.pop %v547
        %v609 = vmul.f32 %v608, %v547
        %v610 = vmul.f32 %v609, %v608
        %v611 = vmul.f32 0.5, %v610
        %v612 = vsub.f32 1.5, %v611
        %v613 = vmul.f32 %v608, %v612
        %vm614 = vweird.f32 %v547
        %vm615 = vweird.f32 %v608
        %vm616 = vmor %vm614, %vm615
        %v617 = vsel %vm616, %v608, %v613
        %v618 = vrsqrt.pop %v548
        %v619 = vmul.f32 %v618, %v548
        %v620 = vmul.f32 %v619, %v618
        %v621 = vmul.f32 0.5, %v620
        %v622 = vsub.f32 1.5, %v621
        %v623 = vmul.f32 %v618, %v622
        %vm624 = vweird.f32 %v548
        %vm625 = vweird.f32 %v618
        %vm626 = vmor %vm624, %vm625
        %v627 = vsel %vm626, %v618, %v623
        %v628 = vrsqrt.pop %v549
        %v629 = vmul.f32 %v628, %v549
        %v630 = vmul.f32 %v629, %v628
        %v631 = vmul.f32 0.5, %v630
        %v632 = vsub.f32 1.5, %v631
        %v633 = vmul.f32 %v628, %v632
        %vm634 = vweird.f32 %v549
        %vm635 = vweird.f32 %v628
        %vm636 = vmor %vm634, %vm635
        %v637 = vsel %vm636, %v628, %v633
        %v638 = vrsqrt.pop %v550
        %v639 = vmul.f32 %v638, %v550
        %v640 = vmul.f32 %v639, %v638
        %v641 = vmul.f32 0.5, %v640
        %v642 = vsub.f32 1.5, %v641
        %v643 = vmul.f32 %v638, %v642
        %vm644 = vweird.f32 %v550
        %vm645 = vweird.f32 %v638
        %vm646 = vmor %vm644, %vm645
        %v647 = vsel %vm646, %v638, %v643
        %v648 = vrsqrt.pop %v551
        %v649 = vmul.f32 %v648, %v551
        %v650 = vmul.f32 %v649, %v648
        %v651 = vmul.f32 0.5, %v650
        %v652 = vsub.f32 1.5, %v651
        %v653 = vmul.f32 %v648, %v652
        %vm654 = vweird.f32 %v551
        %vm655 = vweird.f32 %v648
        %vm656 = vmor %vm654, %vm655
        %v657 = vsel %vm656, %v648, %v653
        %v658 = vrsqrt.pop %v552
        %v659 = vmul.f32 %v658, %v552
        %v660 = vmul.f32 %v659, %v658
        %v661 = vmul.f32 0.5, %v660
        %v662 = vsub.f32 1.5, %v661
        %v663 = vmul.f32 %v658, %v662
        %vm664 = vweird.f32 %v552
        %vm665 = vweird.f32 %v658
        %vm666 = vmor %vm664, %vm665
        %v667 = vsel %vm666, %v658, %v663
        %v668 = vrsqrt.pop %v553
        %v669 = vmul.f32 %v668, %v553
        %v670 = vmul.f32 %v669, %v668
        %v671 = vmul.f32 0.5, %v670
        %v672 = vsub.f32 1.5, %v671
        %v673 = vmul.f32 %v668, %v672
        %vm674 = vweird.f32 %v553
        %vm675 = vweird.f32 %v668
        %vm676 = vmor %vm674, %vm675
        %v677 = vsel %vm676, %v668, %v673
        %v678 = vrsqrt.pop %v554
        %v679 = vmul.f32 %v678, %v554
        %v680 = vmul.f32 %v679, %v678
        %v681 = vmul.f32 0.5, %v680
        %v682 = vsub.f32 1.5, %v681
        %v683 = vmul.f32 %v678, %v682
        %vm684 = vweird.f32 %v554
        %vm685 = vweird.f32 %v678
        %vm686 = vmor %vm684, %vm685
        %v687 = vsel %vm686, %v678, %v683
        %v688 = vrsqrt.pop %v555
        %v689 = vmul.f32 %v688, %v555
        %v690 = vmul.f32 %v689, %v688
        %v691 = vmul.f32 0.5, %v690
        %v692 = vsub.f32 1.5, %v691
        %v693 = vmul.f32 %v688, %v692
        %vm694 = vweird.f32 %v555
        %vm695 = vweird.f32 %v688
        %vm696 = vmor %vm694, %vm695
        %v697 = vsel %vm696, %v688, %v693
        %v698 = vrsqrt.pop %v556
        %v699 = vmul.f32 %v698, %v556
        %v700 = vmul.f32 %v699, %v698
        %v701 = vmul.f32 0.5, %v700
        %v702 = vsub.f32 1.5, %v701
        %v703 = vmul.f32 %v698, %v702
        %vm704 = vweird.f32 %v556
        %vm705 = vweird.f32 %v698
        %vm706 = vmor %vm704, %vm705
        %v707 = vsel %vm706, %v698, %v703
        %v708 = vrsqrt.pop %v557
        %v709 = vmul.f32 %v708, %v557
        %v710 = vmul.f32 %v709, %v708
        %v711 = vmul.f32 0.5, %v710
        %v712 = vsub.f32 1.5, %v711
        %v713 = vmul.f32 %v708, %v712
        %vm714 = vweird.f32 %v557
        %vm715 = vweird.f32 %v708
        %vm716 = vmor %vm714, %vm715
        %v717 = vsel %vm716, %v708, %v713
        %v718 = vmul.f32 %v462, %v567
        %v719 = vmul.f32 %v463, %v577
        %v720 = vmul.f32 %v464, %v587
        %v721 = vmul.f32 %v465, %v597
        %v722 = vmul.f32 %v466, %v607
        %v723 = vmul.f32 %v467, %v617
        %v724 = vmul.f32 %v468, %v627
        %v725 = vmul.f32 %v469, %v637
        %v726 = vmul.f32 %v470, %v647
        %v727 = vmul.f32 %v471, %v657
        %v728 = vmul.f32 %v472, %v667
        %v729 = vmul.f32 %v473, %v677
        %v730 = vmul.f32 %v474, %v687
        %v731 = vmul.f32 %v475, %v697
        %v732 = vmul.f32 %v476, %v707
        %v733 = vmul.f32 %v477, %v717
        %v735 = vperm.slane %v405, 0
        %v737 = vmul.f32 %v718, %v735
        %v738 = vmul.f32 %v719, %v735
        %v739 = vmul.f32 %v720, %v735
        %v740 = vmul.f32 %v721, %v735
        %v741 = vmul.f32 %v722, %v735
        %v742 = vmul.f32 %v723, %v735
        %v743 = vmul.f32 %v724, %v735
        %v744 = vmul.f32 %v725, %v735
        %v745 = vmul.f32 %v726, %v735
        %v746 = vmul.f32 %v727, %v735
        %v747 = vmul.f32 %v728, %v735
        %v748 = vmul.f32 %v729, %v735
        %v749 = vmul.f32 %v730, %v735
        %v750 = vmul.f32 %v731, %v735
        %v751 = vmul.f32 %v732, %v735
        %v752 = vmul.f32 %v733, %v735
        %v754 = vperm.slane %v406, 0
        %v756 = vadd.f32 %v737, %v754
        %v757 = vadd.f32 %v738, %v754
        %v758 = vadd.f32 %v739, %v754
        %v759 = vadd.f32 %v740, %v754
        %v760 = vadd.f32 %v741, %v754
        %v761 = vadd.f32 %v742, %v754
        %v762 = vadd.f32 %v743, %v754
        %v763 = vadd.f32 %v744, %v754
        %v764 = vadd.f32 %v745, %v754
        %v765 = vadd.f32 %v746, %v754
        %v766 = vadd.f32 %v747, %v754
        %v767 = vadd.f32 %v748, %v754
        %v768 = vadd.f32 %v749, %v754
        %v769 = vadd.f32 %v750, %v754
        %v770 = vadd.f32 %v751, %v754
        %v771 = vadd.f32 %v752, %v754
        %v772 = vld [vmem:[#allocation8] sm:$0xff]
        %v773 = vld [vmem:[#allocation8 + $0x8] sm:$0xff]
        %v774 = vld [vmem:[#allocation8 + $0x10] sm:$0xff]
        %v775 = vld [vmem:[#allocation8 + $0x18] sm:$0xff]
        %v776 = vld [vmem:[#allocation8 + $0x20] sm:$0xff]
        %v777 = vld [vmem:[#allocation8 + $0x28] sm:$0xff]
        %v778 = vld [vmem:[#allocation8 + $0x30] sm:$0xff]
        %v779 = vld [vmem:[#allocation8 + $0x38] sm:$0xff]
        %v780 = vld [vmem:[#allocation8 + $0x40] sm:$0xff]
        %v781 = vld [vmem:[#allocation8 + $0x48] sm:$0xff]
        %v782 = vld [vmem:[#allocation8 + $0x50] sm:$0xff]
        %v783 = vld [vmem:[#allocation8 + $0x58] sm:$0xff]
        %v784 = vld [vmem:[#allocation8 + $0x60] sm:$0xff]
        %v785 = vld [vmem:[#allocation8 + $0x68] sm:$0xff]
        %v786 = vld [vmem:[#allocation8 + $0x70] sm:$0xff]
        %v787 = vld [vmem:[#allocation8 + $0x78] sm:$0xff]
        %v788 = vld [vmem:[#allocation8 + $0x80] sm:$0xff]
        %v789 = vld [vmem:[#allocation8 + $0x88] sm:$0xff]
        %v790 = vld [vmem:[#allocation8 + $0x90] sm:$0xff]
        %v791 = vld [vmem:[#allocation8 + $0x98] sm:$0xff]
        %v792 = vld [vmem:[#allocation8 + $0xa0] sm:$0xff]
        %v793 = vld [vmem:[#allocation8 + $0xa8] sm:$0xff]
        %v794 = vld [vmem:[#allocation8 + $0xb0] sm:$0xff]
        %v795 = vld [vmem:[#allocation8 + $0xb8] sm:$0xff]
        %v796 = vld [vmem:[#allocation8 + $0xc0] sm:$0xff]
        %v797 = vld [vmem:[#allocation8 + $0xc8] sm:$0xff]
        %v798 = vld [vmem:[#allocation8 + $0xd0] sm:$0xff]
        %v799 = vld [vmem:[#allocation8 + $0xd8] sm:$0xff]
        %v800 = vld [vmem:[#allocation8 + $0xe0] sm:$0xff]
        %v801 = vld [vmem:[#allocation8 + $0xe8] sm:$0xff]
        %v802 = vld [vmem:[#allocation8 + $0xf0] sm:$0xff]
        %v803 = vld [vmem:[#allocation8 + $0xf8] sm:$0xff]
        %v804 = vld [vmem:[#allocation8 + $0x100] sm:$0xff]
        %v805 = vld [vmem:[#allocation8 + $0x108] sm:$0xff]
        %v806 = vld [vmem:[#allocation8 + $0x110] sm:$0xff]
        %v807 = vld [vmem:[#allocation8 + $0x118] sm:$0xff]
        %v808 = vld [vmem:[#allocation8 + $0x120] sm:$0xff]
        %v809 = vld [vmem:[#allocation8 + $0x128] sm:$0xff]
        %v810 = vld [vmem:[#allocation8 + $0x130] sm:$0xff]
        %v811 = vld [vmem:[#allocation8 + $0x138] sm:$0xff]
        %v812 = vld [vmem:[#allocation8 + $0x140] sm:$0xff]
        %v813 = vld [vmem:[#allocation8 + $0x148] sm:$0xff]
        %v814 = vld [vmem:[#allocation8 + $0x150] sm:$0xff]
        %v815 = vld [vmem:[#allocation8 + $0x158] sm:$0xff]
        %v816 = vld [vmem:[#allocation8 + $0x160] sm:$0xff]
        %v817 = vld [vmem:[#allocation8 + $0x168] sm:$0xff]
        %v818 = vld [vmem:[#allocation8 + $0x170] sm:$0xff]
        %v819 = vld [vmem:[#allocation8 + $0x178] sm:$0xff]
        %v820 = vld [vmem:[%s4] sm:$0x7]
        %v822 = vperm.slane %v820, 0
        %v823 = vperm.slane %v820, 1
        %v824 = vperm.slane %v820, 2
        %828 = vmatpush.msra.mxu0 %v817
        %829 = vmatpush.msra.mxu0 %v814
        %830 = vmatpush.msra.mxu0 %v811
        %831 = vmatpush.msra.mxu0 %v808
        %832 = vmatpush.msra.mxu0 %v805
        %833 = vmatpush.msra.mxu0 %v802
        %834 = vmatpush.msra.mxu0 %v799
        %835 = vmatpush.msra.mxu0 %v796
        %836 = vmatpush.msra.mxu0 %v793
        %837 = vmatpush.msra.mxu0 %v790
        %838 = vmatpush.msra.mxu0 %v787
        %839 = vmatpush.msra.mxu0 %v784
        %840 = vmatpush.msra.mxu0 %v781
        %841 = vmatpush.msra.mxu0 %v778
        %842 = vmatpush.msra.mxu0 %v775
        %843 = vmatpush.msra.mxu0 %v772
        %844 = vmatmul.f32.gmra.mxu0 %v756
        %v845 = vpop.f32.mrf.mxu0
        %v846 = vadd.f32 %v822, %v845
        %847 = vmatmul.f32.gmra.mxu0 %v757
        %v848 = vpop.f32.mrf.mxu0
        %v849 = vadd.f32 %v822, %v848
        %850 = vmatmul.f32.gmra.mxu0 %v758
        %v851 = vpop.f32.mrf.mxu0
        %v852 = vadd.f32 %v822, %v851
        %853 = vmatmul.f32.gmra.mxu0 %v759
        %v854 = vpop.f32.mrf.mxu0
        %v855 = vadd.f32 %v822, %v854
        %856 = vmatmul.f32.gmra.mxu0 %v760
        %v857 = vpop.f32.mrf.mxu0
        %v858 = vadd.f32 %v822, %v857
        %859 = vmatmul.f32.gmra.mxu0 %v761
        %v860 = vpop.f32.mrf.mxu0
        %v861 = vadd.f32 %v822, %v860
        %862 = vmatmul.f32.gmra.mxu0 %v762
        %v863 = vpop.f32.mrf.mxu0
        %v864 = vadd.f32 %v822, %v863
        %865 = vmatmul.f32.gmra.mxu0 %v763
        %v866 = vpop.f32.mrf.mxu0
        %v867 = vadd.f32 %v822, %v866
        %868 = vmatmul.f32.gmra.mxu0 %v764
        %v869 = vpop.f32.mrf.mxu0
        %v870 = vadd.f32 %v822, %v869
        %871 = vmatmul.f32.gmra.mxu0 %v765
        %v872 = vpop.f32.mrf.mxu0
        %v873 = vadd.f32 %v822, %v872
        %874 = vmatmul.f32.gmra.mxu0 %v766
        %v875 = vpop.f32.mrf.mxu0
        %v876 = vadd.f32 %v822, %v875
        %877 = vmatmul.f32.gmra.mxu0 %v767
        %v878 = vpop.f32.mrf.mxu0
        %v879 = vadd.f32 %v822, %v878
        %880 = vmatmul.f32.gmra.mxu0 %v768
        %v881 = vpop.f32.mrf.mxu0
        %v882 = vadd.f32 %v822, %v881
        %883 = vmatmul.f32.gmra.mxu0 %v769
        %v884 = vpop.f32.mrf.mxu0
        %v885 = vadd.f32 %v822, %v884
        %886 = vmatmul.f32.gmra.mxu0 %v770
        %v887 = vpop.f32.mrf.mxu0
        %v888 = vadd.f32 %v822, %v887
        %889 = vmatmul.f32.gmra.mxu0 %v771
        %v890 = vpop.f32.mrf.mxu0
        %v891 = vadd.f32 %v822, %v890
        %892 = vdwg.mxu0
        %893 = vmatpush.msra.mxu0 %v818
        %894 = vmatpush.msra.mxu0 %v815
        %895 = vmatpush.msra.mxu0 %v812
        %896 = vmatpush.msra.mxu0 %v809
        %897 = vmatpush.msra.mxu0 %v806
        %898 = vmatpush.msra.mxu0 %v803
        %899 = vmatpush.msra.mxu0 %v800
        %900 = vmatpush.msra.mxu0 %v797
        %901 = vmatpush.msra.mxu0 %v794
        %902 = vmatpush.msra.mxu0 %v791
        %903 = vmatpush.msra.mxu0 %v788
        %904 = vmatpush.msra.mxu0 %v785
        %905 = vmatpush.msra.mxu0 %v782
        %906 = vmatpush.msra.mxu0 %v779
        %907 = vmatpush.msra.mxu0 %v776
        %908 = vmatpush.msra.mxu0 %v773
        %909 = vmatmul.f32.gmra.mxu0 %v756
        %v910 = vpop.f32.mrf.mxu0
        %v911 = vadd.f32 %v823, %v910
        %912 = vmatmul.f32.gmra.mxu0 %v757
        %v913 = vpop.f32.mrf.mxu0
        %v914 = vadd.f32 %v823, %v913
        %915 = vmatmul.f32.gmra.mxu0 %v758
        %v916 = vpop.f32.mrf.mxu0
        %v917 = vadd.f32 %v823, %v916
        %918 = vmatmul.f32.gmra.mxu0 %v759
        %v919 = vpop.f32.mrf.mxu0
        %v920 = vadd.f32 %v823, %v919
        %921 = vmatmul.f32.gmra.mxu0 %v760
        %v922 = vpop.f32.mrf.mxu0
        %v923 = vadd.f32 %v823, %v922
        %924 = vmatmul.f32.gmra.mxu0 %v761
        %v925 = vpop.f32.mrf.mxu0
        %v926 = vadd.f32 %v823, %v925
        %927 = vmatmul.f32.gmra.mxu0 %v762
        %v928 = vpop.f32.mrf.mxu0
        %v929 = vadd.f32 %v823, %v928
        %930 = vmatmul.f32.gmra.mxu0 %v763
        %v931 = vpop.f32.mrf.mxu0
        %v932 = vadd.f32 %v823, %v931
        %933 = vmatmul.f32.gmra.mxu0 %v764
        %v934 = vpop.f32.mrf.mxu0
        %v935 = vadd.f32 %v823, %v934
        %936 = vmatmul.f32.gmra.mxu0 %v765
        %v937 = vpop.f32.mrf.mxu0
        %v938 = vadd.f32 %v823, %v937
        %939 = vmatmul.f32.gmra.mxu0 %v766
        %v940 = vpop.f32.mrf.mxu0
        %v941 = vadd.f32 %v823, %v940
        %942 = vmatmul.f32.gmra.mxu0 %v767
        %v943 = vpop.f32.mrf.mxu0
        %v944 = vadd.f32 %v823, %v943
        %945 = vmatmul.f32.gmra.mxu0 %v768
        %v946 = vpop.f32.mrf.mxu0
        %v947 = vadd.f32 %v823, %v946
        %948 = vmatmul.f32.gmra.mxu0 %v769
        %v949 = vpop.f32.mrf.mxu0
        %v950 = vadd.f32 %v823, %v949
        %951 = vmatmul.f32.gmra.mxu0 %v770
        %v952 = vpop.f32.mrf.mxu0
        %v953 = vadd.f32 %v823, %v952
        %954 = vmatmul.f32.gmra.mxu0 %v771
        %v955 = vpop.f32.mrf.mxu0
        %v956 = vadd.f32 %v823, %v955
        %957 = vdwg.mxu0
        %958 = vmatpush.msra.mxu0 %v819
        %959 = vmatpush.msra.mxu0 %v816
        %960 = vmatpush.msra.mxu0 %v813
        %961 = vmatpush.msra.mxu0 %v810
        %962 = vmatpush.msra.mxu0 %v807
        %963 = vmatpush.msra.mxu0 %v804
        %964 = vmatpush.msra.mxu0 %v801
        %965 = vmatpush.msra.mxu0 %v798
        %966 = vmatpush.msra.mxu0 %v795
        %967 = vmatpush.msra.mxu0 %v792
        %968 = vmatpush.msra.mxu0 %v789
        %969 = vmatpush.msra.mxu0 %v786
        %970 = vmatpush.msra.mxu0 %v783
        %971 = vmatpush.msra.mxu0 %v780
        %972 = vmatpush.msra.mxu0 %v777
        %973 = vmatpush.msra.mxu0 %v774
        %974 = vmatmul.f32.gmra.mxu0 %v756
        %v975 = vpop.f32.mrf.mxu0
        %v976 = vadd.f32 %v824, %v975
        %977 = vmatmul.f32.gmra.mxu0 %v757
        %v978 = vpop.f32.mrf.mxu0
        %v979 = vadd.f32 %v824, %v978
        %980 = vmatmul.f32.gmra.mxu0 %v758
        %v981 = vpop.f32.mrf.mxu0
        %v982 = vadd.f32 %v824, %v981
        %983 = vmatmul.f32.gmra.mxu0 %v759
        %v984 = vpop.f32.mrf.mxu0
        %v985 = vadd.f32 %v824, %v984
        %986 = vmatmul.f32.gmra.mxu0 %v760
        %v987 = vpop.f32.mrf.mxu0
        %v988 = vadd.f32 %v824, %v987
        %989 = vmatmul.f32.gmra.mxu0 %v761
        %v990 = vpop.f32.mrf.mxu0
        %v991 = vadd.f32 %v824, %v990
        %992 = vmatmul.f32.gmra.mxu0 %v762
        %v993 = vpop.f32.mrf.mxu0
        %v994 = vadd.f32 %v824, %v993
        %995 = vmatmul.f32.gmra.mxu0 %v763
        %v996 = vpop.f32.mrf.mxu0
        %v997 = vadd.f32 %v824, %v996
        %998 = vmatmul.f32.gmra.mxu0 %v764
        %v999 = vpop.f32.mrf.mxu0
        %v1000 = vadd.f32 %v824, %v999
        %1001 = vmatmul.f32.gmra.mxu0 %v765
        %v1002 = vpop.f32.mrf.mxu0
        %v1003 = vadd.f32 %v824, %v1002
        %1004 = vmatmul.f32.gmra.mxu0 %v766
        %v1005 = vpop.f32.mrf.mxu0
        %v1006 = vadd.f32 %v824, %v1005
        %1007 = vmatmul.f32.gmra.mxu0 %v767
        %v1008 = vpop.f32.mrf.mxu0
        %v1009 = vadd.f32 %v824, %v1008
        %1010 = vmatmul.f32.gmra.mxu0 %v768
        %v1011 = vpop.f32.mrf.mxu0
        %v1012 = vadd.f32 %v824, %v1011
        %1013 = vmatmul.f32.gmra.mxu0 %v769
        %v1014 = vpop.f32.mrf.mxu0
        %v1015 = vadd.f32 %v824, %v1014
        %1016 = vmatmul.f32.gmra.mxu0 %v770
        %v1017 = vpop.f32.mrf.mxu0
        %v1018 = vadd.f32 %v824, %v1017
        %1019 = vmatmul.f32.gmra.mxu0 %v771
        %v1020 = vpop.f32.mrf.mxu0
        %v1021 = vadd.f32 %v824, %v1020
        %1022 = vdwg.mxu0
        %1023 = vst [vmem:[%s370] sm:$0xff] %v846
        %1024 = vst [vmem:[%s370 + $0x8] sm:$0xff] %v849
        %1025 = vst [vmem:[%s370 + $0x10] sm:$0xff] %v852
        %1026 = vst [vmem:[%s370 + $0x18] sm:$0xff] %v855
        %1027 = vst [vmem:[%s370 + $0x20] sm:$0xff] %v858
        %1028 = vst [vmem:[%s370 + $0x28] sm:$0xff] %v861
        %1029 = vst [vmem:[%s370 + $0x30] sm:$0xff] %v864
        %1030 = vst [vmem:[%s370 + $0x38] sm:$0xff] %v867
        %1031 = vst [vmem:[%s370 + $0x40] sm:$0xff] %v870
        %1032 = vst [vmem:[%s370 + $0x48] sm:$0xff] %v873
        %1033 = vst [vmem:[%s370 + $0x50] sm:$0xff] %v876
        %1034 = vst [vmem:[%s370 + $0x58] sm:$0xff] %v879
        %1035 = vst [vmem:[%s370 + $0x60] sm:$0xff] %v882
        %1036 = vst [vmem:[%s370 + $0x68] sm:$0xff] %v885
        %1037 = vst [vmem:[%s370 + $0x70] sm:$0xff] %v888
        %1038 = vst [vmem:[%s370 + $0x78] sm:$0xff] %v891
        %1039 = vst [vmem:[%s377] sm:$0xff] %v911
        %1040 = vst [vmem:[%s377 + $0x8] sm:$0xff] %v914
        %1041 = vst [vmem:[%s377 + $0x10] sm:$0xff] %v917
        %1042 = vst [vmem:[%s377 + $0x18] sm:$0xff] %v920
        %1043 = vst [vmem:[%s377 + $0x20] sm:$0xff] %v923
        %1044 = vst [vmem:[%s377 + $0x28] sm:$0xff] %v926
        %1045 = vst [vmem:[%s377 + $0x30] sm:$0xff] %v929
        %1046 = vst [vmem:[%s377 + $0x38] sm:$0xff] %v932
        %1047 = vst [vmem:[%s377 + $0x40] sm:$0xff] %v935
        %1048 = vst [vmem:[%s377 + $0x48] sm:$0xff] %v938
        %1049 = vst [vmem:[%s377 + $0x50] sm:$0xff] %v941
        %1050 = vst [vmem:[%s377 + $0x58] sm:$0xff] %v944
        %1051 = vst [vmem:[%s377 + $0x60] sm:$0xff] %v947
        %1052 = vst [vmem:[%s377 + $0x68] sm:$0xff] %v950
        %1053 = vst [vmem:[%s377 + $0x70] sm:$0xff] %v953
        %1054 = vst [vmem:[%s377 + $0x78] sm:$0xff] %v956
        %1055 = vst [vmem:[%s384] sm:$0xff] %v976
        %1056 = vst [vmem:[%s384 + $0x8] sm:$0xff] %v979
        %1057 = vst [vmem:[%s384 + $0x10] sm:$0xff] %v982
        %1058 = vst [vmem:[%s384 + $0x18] sm:$0xff] %v985
        %1059 = vst [vmem:[%s384 + $0x20] sm:$0xff] %v988
        %1060 = vst [vmem:[%s384 + $0x28] sm:$0xff] %v991
        %1061 = vst [vmem:[%s384 + $0x30] sm:$0xff] %v994
        %1062 = vst [vmem:[%s384 + $0x38] sm:$0xff] %v997
        %1063 = vst [vmem:[%s384 + $0x40] sm:$0xff] %v1000
        %1064 = vst [vmem:[%s384 + $0x48] sm:$0xff] %v1003
        %1065 = vst [vmem:[%s384 + $0x50] sm:$0xff] %v1006
        %1066 = vst [vmem:[%s384 + $0x58] sm:$0xff] %v1009
        %1067 = vst [vmem:[%s384 + $0x60] sm:$0xff] %v1012
        %1068 = vst [vmem:[%s384 + $0x68] sm:$0xff] %v1015
        %1069 = vst [vmem:[%s384 + $0x70] sm:$0xff] %v1018
        %1070 = vst [vmem:[%s384 + $0x78] sm:$0xff] %v1021
        %s1071 = sand.u32 %s164, 1
        %s1072 = scalar_lea.sflag [#allocation4], %s1071
        %s1073 = sand.u32 %s164, 1
        %s1074 = smul.addr %s1073, 128
        %s1075 = scalar_lea.vmem [#allocation10], %s1074
        %s1076 = sand.u32 %s30, 1
        %s1077 = scalar_lea.sflag [#allocation12], %s1076
        %s1078 = sand.u32 %s192, 1
        %s1079 = smul.addr %s1078, 128
        %s1080 = scalar_lea.vmem [#allocation11], %s1079
        %s1081 = sand.u32 %s30, 1
        %s1082 = scalar_lea.sflag [#allocation12], %s1081
        %s1083 = sand.u32 %s220, 1
        %s1084 = smul.addr %s1083, 128
        %s1085 = scalar_lea.vmem [#allocation13], %s1084
        // Predicated region
        $region57: #{tpu_custom_call.1} parent=39 // pred_check
          %p1086 = pneg %p174
        $region58: #{tpu_custom_call.1} parent=39 // pred_check_branch
          %1088 = sbr.rel (%p1086) target = $region60
        $region59: #{tpu_custom_call.1} parent=39 // pred_region
          %s1089 = smul.u32 16, %s35
          %1091 = vsyncadd %s1072, 0
          %s1092 = smul.addr %s34, 32
          %s1093 = sadd.s32 %s1089, %s1092
          %s1094 = smul.addr %s1093, 8
          %s1095 = scalar_lea.hbm %s5, %s1094
          %s1096 = sshll.u32 %s1075, 4
          %s1097 = int_to_ptr.vmem [resolvable:$true] %s1096
          %s1098 = sshll.u32 %s1095, 4
          %s1099 = int_to_ptr.hbm [resolvable:$true] %s1098
          %1104 = dma.vmem_to_hbm [thread:$0]  %s1097, 2048, %s1099, %s1072, 128, 128, 8
        $region60: #{tpu_custom_call.1} parent=39 // pred_fallthru
          _
        // Predicated region
        $region61: #{tpu_custom_call.1} parent=39 // pred_check
          %p1105 = pneg %p202
        $region62: #{tpu_custom_call.1} parent=39 // pred_check_branch
          %1107 = sbr.rel (%p1105) target = $region64
        $region63: #{tpu_custom_call.1} parent=39 // pred_region
          %s1108 = smul.u32 16, %s35
          %1110 = vsyncadd %s1077, 0
          %s1111 = smul.addr %s34, 32
          %s1112 = sadd.s32 %s1108, %s1111
          %s1113 = smul.addr %s1112, 8
          %s1114 = scalar_lea.hbm %s6, %s1113
          %s1115 = sshll.u32 %s1080, 4
          %s1116 = int_to_ptr.vmem [resolvable:$true] %s1115
          %s1117 = sshll.u32 %s1114, 4
          %s1118 = int_to_ptr.hbm [resolvable:$true] %s1117
          %1123 = dma.vmem_to_hbm [thread:$0]  %s1116, 2048, %s1118, %s1077, 128, 128, 8
        $region64: #{tpu_custom_call.1} parent=39 // pred_fallthru
          _
        // Predicated region
        $region65: #{tpu_custom_call.1} parent=39 // pred_check
          %p1124 = pneg %p230
        $region66: #{tpu_custom_call.1} parent=39 // pred_check_branch
          %1126 = sbr.rel (%p1124) target = $region68
        $region67: #{tpu_custom_call.1} parent=39 // pred_region
          %s1127 = smul.u32 16, %s35
          %1129 = vsyncadd %s1082, 0
          %s1130 = smul.addr %s34, 32
          %s1131 = sadd.s32 %s1127, %s1130
          %s1132 = smul.addr %s1131, 8
          %s1133 = scalar_lea.hbm %s7, %s1132
          %s1134 = sshll.u32 %s1085, 4
          %s1135 = int_to_ptr.vmem [resolvable:$true] %s1134
          %s1136 = sshll.u32 %s1133, 4
          %s1137 = int_to_ptr.hbm [resolvable:$true] %s1136
          %1142 = dma.vmem_to_hbm [thread:$0]  %s1135, 2048, %s1137, %s1082, 128, 128, 8
        $region68: #{tpu_custom_call.1} parent=39 // pred_fallthru
          _
      $region40: #{tpu_custom_call.1} parent=5 // pred_fallthru
        _
      %p1143 = scmp.le.s32.totalorder 2, %s25
      // Predicated region
      $region69: #{tpu_custom_call.1} parent=5 // pred_check
        %p1144 = pneg %p1143
      $region70: #{tpu_custom_call.1} parent=5 // pred_check_branch
        %1146 = sbr.rel (%p1144) target = $region72
      $region71: #{tpu_custom_call.1} parent=5 // pred_region
        %s1147 = ssub.s32 %s25, 2
        // Predicated region
        $region73: #{tpu_custom_call.1} parent=71 // pred_check
          %p1148 = pneg %p180
        $region74: #{tpu_custom_call.1} parent=71 // pred_check_branch
          %1150 = sbr.rel (%p1148) target = $region76
        $region75: #{tpu_custom_call.1} parent=71 // pred_region
          %s1151 = sand.u32 %s165, 1
          %s1152 = scalar_lea.sflag [#allocation4], %s1151
          %s1153 = sand.u32 %s165, 1
          %s1154 = smul.addr %s1153, 128
          %s1155 = scalar_lea.vmem [#allocation10], %s1154
          %1157 = dma.done %s1152, 2048
        $region76: #{tpu_custom_call.1} parent=71 // pred_fallthru
          _
        // Predicated region
        $region77: #{tpu_custom_call.1} parent=71 // pred_check
          %p1158 = pneg %p208
        $region78: #{tpu_custom_call.1} parent=71 // pred_check_branch
          %1160 = sbr.rel (%p1158) target = $region80
        $region79: #{tpu_custom_call.1} parent=71 // pred_region
          %s1161 = sand.u32 %s31, 1
          %s1162 = scalar_lea.sflag [#allocation12], %s1161
          %s1163 = sand.u32 %s193, 1
          %s1164 = smul.addr %s1163, 128
          %s1165 = scalar_lea.vmem [#allocation11], %s1164
          %1167 = dma.done %s1162, 2048
        $region80: #{tpu_custom_call.1} parent=71 // pred_fallthru
          _
        // Predicated region
        $region81: #{tpu_custom_call.1} parent=71 // pred_check
          %p1168 = pneg %p236
        $region82: #{tpu_custom_call.1} parent=71 // pred_check_branch
          %1170 = sbr.rel (%p1168) target = $region84
        $region83: #{tpu_custom_call.1} parent=71 // pred_region
          %s1171 = sand.u32 %s31, 1
          %s1172 = scalar_lea.sflag [#allocation12], %s1171
          %s1173 = sand.u32 %s221, 1
          %s1174 = smul.addr %s1173, 128
          %s1175 = scalar_lea.vmem [#allocation13], %s1174
          %1177 = dma.done %s1172, 2048
        $region84: #{tpu_custom_call.1} parent=71 // pred_fallthru
          _
      $region72: #{tpu_custom_call.1} parent=5 // pred_fallthru
        _
    $region6: #{tpu_custom_call.1} parent=1 // loop_footer
      %s29 = sadd.s32 1, %s25
    $region7: #{tpu_custom_call.1} parent=1 // loop_footer_branch
      %24 = sbr.rel target = $region3
    $region8: #{tpu_custom_call.1} parent=1 // loop_exit
      _
    %1178 = vsyncpa [#allocation3], 1
    %s1179 = scalar_lea.sflag [#allocation3], 1
    %1180 = vsyncpa %s1179, 1
    %1181 = vsyncpa [#allocation6], 1
    %1182 = vsyncpa [#allocation9], 1
    %1183 = vsyncpa [#allocation4], 1
    %s1184 = scalar_lea.sflag [#allocation4], 1
    %1185 = vsyncpa %s1184, 1
    %1186 = vsyncpa [#allocation12], 1
    %s1187 = scalar_lea.sflag [#allocation12], 1
    %1188 = vsyncpa %s1187, 1

</llo_original>
